<compile_context>
chip_gen: v5e
topology: v5e:2x2
jax: 0.10.0
libtpu: 0.0.40
codegen_flags: <defaults>
</compile_context>

<pallas_src>
import math
from functools import partial

import jax
import jax.numpy as jnp
from jax.experimental import pallas as pl
from jax.experimental.pallas import tpu as pltpu


def _pick_tile(n, cap):
    """Largest tile t <= cap with n % t == 0 and t % 8 == 0; falls back to n."""
    if n <= cap:
        return n
    for t in range(cap, 7, -1):
        if n % t == 0 and t % 8 == 0:
            return t
    # TODO(synk): ragged n (no multiple-of-8 divisor) falls back to one full
    #             tile; a masked tail path would be needed for huge prime S.
    return n


def _vmem_cap_bytes():
    try:
        return int(pltpu.get_tpu_info().vmem_capacity_bytes)
    except Exception:
        return 64 * 1024 * 1024  # v7x per-TensorCore VMEM (most restrictive gen)


def _vmem_limit(needed_bytes):
    """Generation-aware VMEM budget: 2x the derived need, >=32 MiB, <=75% phys."""
    cap = int(0.75 * _vmem_cap_bytes())
    return min(cap, max(32 * 1024 * 1024, 2 * int(needed_bytes)))


def _qkv_proj_kernel(x_ref, w_ref, b_ref, qkv_ref):
    """Fused Q|K|V projection for one row tile: (Tm, D) @ (D, 3D) + bias."""
    acc = jnp.dot(x_ref[...], w_ref[...], preferred_element_type=jnp.float32)
    qkv_ref[...] = (acc + b_ref[...]).astype(qkv_ref.dtype)


def _flash_attn_kernel(q_ref, k_ref, v_ref, wo_ref, bo_ref, o_ref,
                       m_sc, l_sc, acc_sc, *, num_heads):
    """One (batch, q-tile, k-tile) grid point of online-softmax attention with
    the output projection fused into the final k-step.

    q_ref  : (1, H, Tq, hd) bf16  (softmax scale already folded into Wq/bq)
    k_ref  : (1, H, Tk, hd) bf16
    v_ref  : (1, H, Tk, hd) bf16
    wo_ref : (H, hd, D)     bf16  per-head slices of the output projection
    bo_ref : (1, D)         f32
    o_ref  : (1, Tq, D)           output tile (written at the last k-step)
    m/l/acc: running max / sum / weighted-V scratch (persist across k-steps)
    """
    ki = pl.program_id(2)

    @pl.when(ki == 0)
    def _():
        m_sc[...] = jnp.full_like(m_sc[...], -jnp.inf)
        l_sc[...] = jnp.zeros_like(l_sc[...])
        acc_sc[...] = jnp.zeros_like(acc_sc[...])

    q = q_ref[0]                                    # (H, Tq, hd)
    k = k_ref[0]                                    # (H, Tk, hd)
    v = v_ref[0]                                    # (H, Tk, hd)

    # Heads stay in the leading (batch) position end-to-end: no relayout.
    s = jnp.einsum("hqd,hkd->hqk", q, k,
                   preferred_element_type=jnp.float32)        # (H, Tq, Tk) f32

    m_prev = m_sc[...]
    m_new = jnp.maximum(m_prev, s.max(axis=-1, keepdims=True))
    alpha = jnp.exp(m_prev - m_new)
    p = jnp.exp(s - m_new)
    l_sc[...] = alpha * l_sc[...] + p.sum(axis=-1, keepdims=True)
    acc_sc[...] = alpha * acc_sc[...] + jnp.einsum(
        "hqk,hkd->hqd", p.astype(v.dtype), v,
        preferred_element_type=jnp.float32)
    m_sc[...] = m_new
    # (attention dropout = identity in eval mode)

    @pl.when(ki == pl.num_programs(2) - 1)
    def _():
        inv_l = pl.reciprocal(l_sc[...], approx=True)          # EUP, off VALU path
        o_h = (acc_sc[...] * inv_l).astype(jnp.bfloat16)       # (H, Tq, hd)
        # Fused output projection accumulated per head -> no head concat /
        # lane-merging reshape.  H is a small static constant, so unroll.
        tq, d_model = o_ref.shape[1], o_ref.shape[2]
        out = jnp.zeros((tq, d_model), jnp.float32)
        for h in range(num_heads):
            out = out + jnp.dot(o_h[h], wo_ref[h],
                                preferred_element_type=jnp.float32)
        o_ref[0] = (out + bo_ref[...]).astype(o_ref.dtype)


def multi_head_attention(x, params, *, num_heads):
    """Forward pass of the PyTorch MultiHeadAttention module (eval mode).

    x: (B, S, D).  params: torch-style (out, in) weights and (out,) biases.
    """
    B, S, D = x.shape
    hd = D // num_heads
    assert hd * num_heads == D, "dim must be divisible by num_heads"
    scale = 1.0 / math.sqrt(hd)

    # Host-side parameter prep: torch (out,in) -> (in,out); fuse Q|K|V weights;
    # fold the 1/sqrt(hd) softmax scale into the Q weights/bias (free).
    wqkv = jnp.concatenate(
        [params["wq"].T * scale, params["wk"].T, params["wv"].T],
        axis=1).astype(jnp.bfloat16)                                    # (D, 3D)
    bqkv = jnp.concatenate(
        [params["bq"] * scale, params["bk"], params["bv"]]
    ).reshape(1, 3 * D).astype(jnp.float32)                             # (1, 3D)
    wo_r = params["wo"].T.reshape(num_heads, hd, D).astype(jnp.bfloat16)  # (H, hd, D)
    bo = params["bo"].reshape(1, D).astype(jnp.float32)

    # ----- Stage 1: fused QKV projection (computed exactly once per token) -----
    BS = B * S
    tm = _pick_tile(BS, cap=512)
    xf = x.reshape(BS, D).astype(jnp.bfloat16)

    proj_vmem = (2 * (tm * D * 2 + tm * 3 * D * 2)        # x / qkv blocks, 2 bufs
                 + 2 * (D * 3 * D * 2 + 3 * D * 4)        # weights + bias
                 + tm * 3 * D * 4)                        # f32 accumulator
    qkv = pl.pallas_call(
        _qkv_proj_kernel,
        out_shape=jax.ShapeDtypeStruct((BS, 3 * D), jnp.bfloat16),
        grid_spec=pltpu.PrefetchScalarGridSpec(
            num_scalar_prefetch=0,
            grid=(BS // tm,),
            in_specs=[
                pl.BlockSpec((tm, D), lambda i: (i, 0)),
                # Constant index maps: weights/bias are DMA'd once, not per step.
                pl.BlockSpec((D, 3 * D), lambda i: (0, 0)),
                pl.BlockSpec((1, 3 * D), lambda i: (0, 0)),
            ],
            out_specs=pl.BlockSpec((tm, 3 * D), lambda i: (i, 0)),
        ),
        compiler_params=pltpu.CompilerParams(
            dimension_semantics=("parallel",),
            vmem_limit_bytes=_vmem_limit(proj_vmem),
        ),
        cost_estimate=pl.CostEstimate(
            flops=2 * BS * D * 3 * D,
            transcendentals=0,
            bytes_accessed=BS * D * 2 + BS * 3 * D * 2 + D * 3 * D * 2),
    )(xf, wqkv, bqkv)

    # One-off layout plumbing (outside the attention grid): heads-major
    # (B, H, S, hd) so the attention kernel never splits the lane axis or
    # relays heads to the front per tile.
    qkv = qkv.reshape(B, S, 3, num_heads, hd)
    q = qkv[:, :, 0].transpose(0, 2, 1, 3)
    k = qkv[:, :, 1].transpose(0, 2, 1, 3)
    v = qkv[:, :, 2].transpose(0, 2, 1, 3)

    # ----- Stage 2: flash attention + fused output projection -----
    # Tq/Tk capped at 256: fills the MXU on v6e/v7x while the live (H, Tq, Tk)
    # score block stays independent of S (fits v7x's 64 MiB VMEM).
    tq = _pick_tile(S, cap=256)
    tk = _pick_tile(S, cap=256)
    nq, nk = S // tq, S // tk
    out_itemsize = jnp.dtype(x.dtype).itemsize

    attn_vmem = (
        2 * (num_heads * tq * hd * 2              # q block (2 bufs)
             + 2 * num_heads * tk * hd * 2        # k + v blocks (2 bufs)
             + tq * D * out_itemsize)             # output block (2 bufs)
        # Constant index maps -> fetched once.  (pl.Buffered(1) would also
        # halve their residency; left at default buffering for portability.)
        + 2 * (D * D * 2 + D * 4)                 # Wo_r + bo
        + num_heads * tq * (hd + 2) * 4           # m / l / acc scratch
        + 3 * num_heads * tq * tk * 4             # s / p / exp live values
        + tq * D * 4)                             # fused output-proj accumulator

    kernel = partial(_flash_attn_kernel, num_heads=num_heads)
    return pl.pallas_call(
        kernel,
        out_shape=jax.ShapeDtypeStruct((B, S, D), x.dtype),
        grid_spec=pltpu.PrefetchScalarGridSpec(
            num_scalar_prefetch=0,
            grid=(B, nq, nk),
            in_specs=[
                pl.BlockSpec((1, num_heads, tq, hd), lambda b, qi, ki: (b, 0, qi, 0)),
                pl.BlockSpec((1, num_heads, tk, hd), lambda b, qi, ki: (b, 0, ki, 0)),
                pl.BlockSpec((1, num_heads, tk, hd), lambda b, qi, ki: (b, 0, ki, 0)),
                pl.BlockSpec((num_heads, hd, D), lambda b, qi, ki: (0, 0, 0)),
                pl.BlockSpec((1, D), lambda b, qi, ki: (0, 0)),
            ],
            out_specs=pl.BlockSpec((1, tq, D), lambda b, qi, ki: (b, qi, 0)),
            scratch_shapes=[
                pltpu.VMEM((num_heads, tq, 1), jnp.float32),    # running max
                pltpu.VMEM((num_heads, tq, 1), jnp.float32),    # running sum
                pltpu.VMEM((num_heads, tq, hd), jnp.float32),   # running P @ V
            ],
        ),
        compiler_params=pltpu.CompilerParams(
            dimension_semantics=("parallel", "parallel", "arbitrary"),
            vmem_limit_bytes=_vmem_limit(attn_vmem),
        ),
        cost_estimate=pl.CostEstimate(
            flops=4 * B * num_heads * S * S * hd + 2 * B * S * D * D,
            transcendentals=B * num_heads * S * S,
            bytes_accessed=(3 * B * S * D * 2            # q, k, v (bf16)
                            + B * S * D * out_itemsize   # output
                            + D * D * 2 + D * 4)),       # Wo + bo
    )(q, k, v, wo_r, bo)


def _reference(x, params, num_heads):
    """Pure-JAX f32 reference mirroring the PyTorch forward (eval mode)."""
    B, S, D = x.shape
    hd = D // num_heads

    def lin(t, w, b):  # torch nn.Linear: t @ W^T + b
        return jnp.einsum("bsd,od->bso", t, w) + b

    q = lin(x, params["wq"], params["bq"]).reshape(B, S, num_heads, hd).transpose(0, 2, 1, 3)
    k = lin(x, params["wk"], params["bk"]).reshape(B, S, num_heads, hd).transpose(0, 2, 1, 3)
    v = lin(x, params["wv"], params["bv"]).reshape(B, S, num_heads, hd).transpose(0, 2, 1, 3)

    s = jnp.einsum("bhqd,bhkd->bhqk", q, k) / math.sqrt(hd)
    p = jax.nn.softmax(s, axis=-1)
    o = jnp.einsum("bhqk,bhkd->bhqd", p, v)
    o = o.transpose(0, 2, 1, 3).reshape(B, S, D)
    return lin(o, params["wo"], params["bo"])


if __name__ == "__main__":
    # Small shapes consistent with the module (dim divisible by num_heads).
    B, S, D, H = 2, 8, 32, 4

    key = jax.random.PRNGKey(0)
    keys = jax.random.split(key, 9)
    x = jax.random.normal(keys[0], (B, S, D), dtype=jnp.float32)

    # Deterministic parameter init (torch nn.Linear-style uniform bound).
    bound = 1.0 / math.sqrt(D)

    def u(k, shape):
        return jax.random.uniform(k, shape, jnp.float32, -bound, bound)

    params = {
        "wq": u(keys[1], (D, D)), "bq": u(keys[2], (D,)),
        "wk": u(keys[3], (D, D)), "bk": u(keys[4], (D,)),
        "wv": u(keys[5], (D, D)), "bv": u(keys[6], (D,)),
        "wo": u(keys[7], (D, D)), "bo": u(keys[8], (D,)),
    }

    out = multi_head_attention(x, params, num_heads=H)
    out = jax.block_until_ready(out)

    ref = _reference(x, params, H)
    assert out.shape == (B, S, D)
    # bf16 activations/weights + approx reciprocal -> looser tolerance than f32.
    max_err = float(jnp.max(jnp.abs(out - ref)))
    assert jnp.allclose(out, ref, atol=5e-2, rtol=5e-2), \
        f"mismatch vs reference (max abs err={max_err})"

    print("KERNEL_OK")
</pallas_src>

<mosaic_0001>
module attributes {stable_mosaic.version = 11 : i64} {
  func.func @_qkv_proj_kernel(%arg0: i32, %arg1: memref<16x32xbf16, #tpu.memory_space<vmem>>, %arg2: memref<32x96xbf16, #tpu.memory_space<vmem>>, %arg3: memref<1x96xf32, #tpu.memory_space<vmem>>, %arg4: memref<16x96xbf16, #tpu.memory_space<vmem>>) attributes {dimension_semantics = [#tpu.dimension_semantics<parallel>], iteration_bounds = array<i64: 1>, scalar_prefetch = 0 : i64, scratch_operands = 0 : i64, tpu.core_type = #tpu.core_type<tc>, window_params = [{transform_indices = @transform_0, window_bounds = array<i64: 16, 32>}, {pipeline_mode = #tpu.pipeline_mode<synchronous>, transform_indices = @transform_1, window_bounds = array<i64: 32, 96>}, {pipeline_mode = #tpu.pipeline_mode<synchronous>, transform_indices = @transform_2, window_bounds = array<i64: 1, 96>}, {transform_indices = @transform_3, window_bounds = array<i64: 16, 96>}]} {
    %c0 = arith.constant 0 : index
    %c0_0 = arith.constant 0 : index
    %0 = vector.load %arg1[%c0, %c0_0] : memref<16x32xbf16, #tpu.memory_space<vmem>>, vector<16x32xbf16>
    %c0_1 = arith.constant 0 : index
    %c0_2 = arith.constant 0 : index
    %1 = vector.load %arg2[%c0_1, %c0_2] : memref<32x96xbf16, #tpu.memory_space<vmem>>, vector<32x96xbf16>
    %cst = arith.constant dense<0.000000e+00> : vector<16x96xf32>
    %2 = tpu.matmul %0, %1, %cst {dimension_numbers = #tpu.dot_dimension_numbers<[1], [0], [0], [1], [0, 0, 1, 1], [], []>} : vector<16x32xbf16>, vector<32x96xbf16>, vector<16x96xf32> -> vector<16x96xf32>
    %c0_3 = arith.constant 0 : index
    %c0_4 = arith.constant 0 : index
    %3 = vector.load %arg3[%c0_3, %c0_4] : memref<1x96xf32, #tpu.memory_space<vmem>>, vector<1x96xf32>
    %4 = vector.broadcast %3 : vector<1x96xf32> to vector<16x96xf32>
    %5 = arith.addf %2, %4 : vector<16x96xf32>
    %6 = arith.truncf %5 : vector<16x96xf32> to vector<16x96xbf16>
    %c0_5 = arith.constant 0 : index
    %c0_6 = arith.constant 0 : index
    %7 = vector.load %arg4[%c0_5, %c0_6] : memref<16x96xbf16, #tpu.memory_space<vmem>>, vector<16x96xbf16>
    tpu.vector_store %arg4[%c0_5, %c0_6], %6 {strides = array<i32>} : memref<16x96xbf16, #tpu.memory_space<vmem>>, vector<16x96xbf16>,
    return
  }
  func.func @transform_0(%arg0: i32) -> (i32, i32) {
    %c0_i32 = arith.constant 0 : i32
    %c0_i32_0 = arith.constant 0 : i32
    return %arg0, %c0_i32 : i32, i32
  }
  func.func @transform_1(%arg0: i32) -> (i32, i32) {
    %c0_i32 = arith.constant 0 : i32
    %c0_i32_0 = arith.constant 0 : i32
    %c0_i32_1 = arith.constant 0 : i32
    return %c0_i32, %c0_i32_0 : i32, i32
  }
  func.func @transform_2(%arg0: i32) -> (i32, i32) {
    %c0_i32 = arith.constant 0 : i32
    %c0_i32_0 = arith.constant 0 : i32
    %c0_i32_1 = arith.constant 0 : i32
    return %c0_i32, %c0_i32_0 : i32, i32
  }
  func.func @transform_3(%arg0: i32) -> (i32, i32) {
    %c0_i32 = arith.constant 0 : i32
    %c0_i32_0 = arith.constant 0 : i32
    return %arg0, %c0_i32 : i32, i32
  }
}

</mosaic_0001>

<llo_original>
// kernel: tpu_custom_call.1
$region0: #{tpu_custom_call.1}
  #allocation0 [shape = 'u32[]', space=smem, size = 0x4, offset = 0x4, fixed_abs, tag = 'smem constant byte address 0x4 - core index']
  #allocation1 [shape = 'u32[72,128]{1,0:T(1,128)}', space=vmem, size = 0x9000, scoped, tag = 'internal scratch']
  %s0 = inlined_call_operand.hbm [shape: bf16[16,32], index: 0, kind: input, shape index: {}]
  %s1 = inlined_call_operand.hbm [shape: bf16[32,96], index: 1, kind: input, shape index: {}]
  %s2 = inlined_call_operand.vmem [shape: f32[1,96], index: 2, kind: input, shape index: {}]
  %s3 = inlined_call_operand.hbm [shape: bf16[16,96], index: 3, kind: output, shape index: {}]
  %s4 = sld [smem:[#allocation0]]
  $region30: #{tpu_custom_call.1} parent=0
    _
  %s6 = ssub.s32 1, %s4
  %s7 = scalar_select 0, %s6, %s4
  $region1: #{tpu_custom_call.1} parent=0
    #allocation2 [shape = 'u8[4096]{0}', space=vmem, size = 0x1000, scoped, tag = 'input window, operand 0, single buffered']
    #allocation3 [shape = 's32[1]{0}', space=sflag, size = 0x4, scoped, tag = 'scoped memory for tpu_custom_call.1']
    #allocation4 [shape = 's32[1]{0}', space=sflag, size = 0x4, scoped, tag = 'scoped memory for tpu_custom_call.1']
    #allocation5 [shape = 'u8[8192]{0}', space=vmem, size = 0x2000, scoped, tag = 'input window, operand 1, single buffered']
    #allocation6 [shape = 's32[1]{0}', space=sflag, size = 0x4, scoped, tag = 'scoped memory for tpu_custom_call.1']
    #allocation7 [shape = 'u8[4096]{0}', space=vmem, size = 0x1000, scoped, tag = 'output window, operand 0, single buffered']
    %8 = vsyncpa [#allocation3], 0
    %9 = vsyncpa [#allocation6], 0
    %10 = vsyncpa [#allocation4], 0
    // Predicated region
    $region2: #{tpu_custom_call.1} parent=1 // pred_check
      _
    $region3: #{tpu_custom_call.1} parent=1 // pred_check_branch
      %12 = sbr.rel (0) target = $region5
    $region4: #{tpu_custom_call.1} parent=1 // pred_region
      %14 = vsyncadd [#allocation3], 0
      %s15 = sshll.u32 %s0, 4
      %s16 = int_to_ptr.hbm [resolvable:$true] %s15
      %s17 = sshll.u32 [#allocation2], 4
      %s18 = int_to_ptr.vmem [resolvable:$true] %s17
      %23 = dma.hbm_to_vmem [thread:$0]  %s16, 128, %s18, [#allocation3], 64, 64, 4
    $region5: #{tpu_custom_call.1} parent=1 // pred_fallthru
      _
    // Predicated region
    $region6: #{tpu_custom_call.1} parent=1 // pred_check
      _
    $region7: #{tpu_custom_call.1} parent=1 // pred_check_branch
      %25 = sbr.rel (0) target = $region9
    $region8: #{tpu_custom_call.1} parent=1 // pred_region
      %27 = vsyncadd [#allocation6], 0
      %s28 = sshll.u32 %s1, 4
      %s29 = int_to_ptr.hbm [resolvable:$true] %s28
      %s30 = sshll.u32 [#allocation5], 4
      %s31 = int_to_ptr.vmem [resolvable:$true] %s30
      %36 = dma.hbm_to_vmem [thread:$0]  %s29, 256, %s31, [#allocation6], 64, 64, 4
    $region9: #{tpu_custom_call.1} parent=1 // pred_fallthru
      _
    // Predicated region
    $region10: #{tpu_custom_call.1} parent=1 // pred_check
      _
    $region11: #{tpu_custom_call.1} parent=1 // pred_check_branch
      %38 = sbr.rel (0) target = $region13
    $region12: #{tpu_custom_call.1} parent=1 // pred_region
      _
    $region13: #{tpu_custom_call.1} parent=1 // pred_fallthru
      _
    // Predicated region
    $region14: #{tpu_custom_call.1} parent=1 // pred_check
      _
    $region15: #{tpu_custom_call.1} parent=1 // pred_check_branch
      %40 = sbr.rel (0) target = $region17
    $region16: #{tpu_custom_call.1} parent=1 // pred_region
      %42 = dma.done [#allocation3], 128
    $region17: #{tpu_custom_call.1} parent=1 // pred_fallthru
      _
    // Predicated region
    $region18: #{tpu_custom_call.1} parent=1 // pred_check
      _
    $region19: #{tpu_custom_call.1} parent=1 // pred_check_branch
      %44 = sbr.rel (0) target = $region21
    $region20: #{tpu_custom_call.1} parent=1 // pred_region
      %46 = dma.done [#allocation6], 256
    $region21: #{tpu_custom_call.1} parent=1 // pred_fallthru
      _
    %v48 = vld [vmem:[#allocation2] sm:$0xf]
    %v49 = vld [vmem:[#allocation2 + $0x4] sm:$0xf]
    %v50 = vld [vmem:[#allocation5] sm:$0xf]
    %v51 = vld [vmem:[#allocation5 + $0x4] sm:$0xf]
    %v52 = vld [vmem:[#allocation5 + $0x8] sm:$0xf]
    %v53 = vld [vmem:[#allocation5 + $0xc] sm:$0xf]
    %v54 = vld [vmem:[%s2] sm:$0x1]
    %v56 = vperm.slane %v54, 0
    %v60 = vunpack.c.l.b16 %v48
    %v61 = vunpack.c.l.b16 %v49
    %v62 = vpack.c.b16 %v61, %v60
    %v67 = vunpack.c.l.b16 %v50
    %v68 = vunpack.c.l.b16 %v51
    %v69 = vunpack.c.l.b16 %v52
    %v70 = vunpack.c.l.b16 %v53
    %v71 = vpack.c.b16 %v68, %v67
    %v72 = vpack.c.b16 %v70, %v69
    %vm75 = vcmask 261120
    %v77 = vsel %vm75, %v62, 0
    %79 = vmatpush.bf16.msra.mxu0 0
    %80 = vmatpush.bf16.msra.mxu0 0
    %81 = vmatpush.bf16.msra.mxu0 0
    %82 = vmatpush.bf16.msra.mxu0 0
    %83 = vmatpush.bf16.msra.mxu0 0
    %84 = vmatpush.bf16.msra.mxu0 0
    %85 = vmatpush.bf16.msra.mxu0 %v72
    %86 = vmatpush.bf16.msra.mxu0 %v71
    %87 = vmatmul.bf16.gmra.mxu0 %v77
    %v88 = vpop.f32.mrf.mxu0
    %v89 = vadd.f32 %v56, %v88
    %v90 = vpop.f32.mrf.mxu0
    %v91 = vadd.f32 %v56, %v90
    %92 = vdwg.mxu0
    %v93 = vpack.c.bf16 %v89, %v89
    %v94 = vpack.c.bf16 %v91, %v91
    %vm95 = vcmask 781312
    %96 = vst.msk [vmem:[#allocation7] sm:$0xf] %vm95, %v93
    %97 = vst.msk [vmem:[#allocation7 + $0x4] sm:$0xf] %vm95, %v94
    // Predicated region
    $region22: #{tpu_custom_call.1} parent=1 // pred_check
      _
    $region23: #{tpu_custom_call.1} parent=1 // pred_check_branch
      %99 = sbr.rel (0) target = $region25
    $region24: #{tpu_custom_call.1} parent=1 // pred_region
      %101 = vsyncadd [#allocation4], 0
      %s102 = sshll.u32 [#allocation7], 4
      %s103 = int_to_ptr.vmem [resolvable:$true] %s102
      %s104 = sshll.u32 %s3, 4
      %s105 = int_to_ptr.hbm [resolvable:$true] %s104
      %110 = dma.vmem_to_hbm [thread:$0]  %s103, 128, %s105, [#allocation4], 64, 64, 4
    $region25: #{tpu_custom_call.1} parent=1 // pred_fallthru
      _
    // Predicated region
    $region26: #{tpu_custom_call.1} parent=1 // pred_check
      _
    $region27: #{tpu_custom_call.1} parent=1 // pred_check_branch
      %112 = sbr.rel (0) target = $region29
    $region28: #{tpu_custom_call.1} parent=1 // pred_region
      %114 = dma.done [#allocation4], 128
    $region29: #{tpu_custom_call.1} parent=1 // pred_fallthru
      _
    %115 = vsyncpa [#allocation3], 1
    %116 = vsyncpa [#allocation6], 1
    %117 = vsyncpa [#allocation4], 1

</llo_original>
